<compile_context>
chip_gen: v5e
topology: v5e:2x2
jax: 0.10.0
libtpu: 0.0.40
codegen_flags: <defaults>
</compile_context>

<pallas_src>
from collections import OrderedDict
from functools import partial

import jax
import jax.numpy as jnp
from jax.experimental import pallas as pl
from jax.experimental.pallas import tpu as pltpu


# ----------------------------------------------------------------------------
# Pallas kernel: block-diagonal Conv1d('same', K) + bias + sigmoid for ALL
# groups, one batch element (one padded length-L segment) per grid step.
# ----------------------------------------------------------------------------
def _conv1d_sigmoid_kernel(x_ref, w_ref, b_ref, o_ref, *, K, L):
    # x_ref: (1, C_tot, L + K - 1)   channel-stacked, per-segment zero-padded
    # w_ref: (K, C_out_tot, C_tot)   block-diagonal weights, one slab per tap
    # b_ref: (C_out_tot, 1)
    # o_ref: (1, C_out_tot, L)       concatenated-channel output (lane-dense)
    #
    # K small & static -> unrolled; each tap is a plain static ref slice (no
    # masks, no im2col temp) feeding one MXU dot; accumulation stays f32.
    acc = jnp.dot(w_ref[0], x_ref[0, :, 0:L],
                  preferred_element_type=jnp.float32)
    for k in range(1, K):
        acc = acc + jnp.dot(w_ref[k], x_ref[0, :, k:k + L],
                            preferred_element_type=jnp.float32)
    acc = acc + b_ref[...]                       # bias broadcast over lanes

    # Exact sigmoid via a single EUP tanh: sigmoid(x) = 0.5*tanh(0.5*x) + 0.5
    o_ref[0, :, :] = (0.5 * jnp.tanh(0.5 * acc) + 0.5).astype(o_ref.dtype)


def _context_forward(w3, b2, x_tuple, *, K, C_out_tot, compute_dtype):
    """Jitted forward: channel-concat + per-segment pad, then one pallas_call
    with a batch grid (double-buffered DMA pipeline, megacore-parallel)."""
    x_all = jnp.concatenate(x_tuple, axis=1)                  # (N, C_tot, L)
    N, C_tot, L = x_all.shape
    pad = (K - 1) // 2
    # Per-segment 'same' padding -> in-kernel taps need no boundary masking.
    xp = jnp.pad(x_all, ((0, 0), (0, 0), (pad, pad))).astype(compute_dtype)

    return pl.pallas_call(
        partial(_conv1d_sigmoid_kernel, K=K, L=L),
        out_shape=jax.ShapeDtypeStruct((N, C_out_tot, L), jnp.float32),
        grid_spec=pltpu.PrefetchScalarGridSpec(
            num_scalar_prefetch=0,
            grid=(N,),                       # one padded segment per step
            in_specs=[
                pl.BlockSpec((1, C_tot, L + 2 * pad), lambda n: (n, 0, 0)),
                pl.BlockSpec((K, C_out_tot, C_tot), lambda n: (0, 0, 0)),
                pl.BlockSpec((C_out_tot, 1), lambda n: (0, 0)),
            ],
            out_specs=pl.BlockSpec((1, C_out_tot, L), lambda n: (n, 0, 0)),
        ),
        # Batch steps are independent -> "parallel": v7x's 2 TensorCores split
        # the grid; no-op on v5e/v6e.  Per-step VMEM is small (<< scoped
        # default on every generation), so no vmem_limit_bytes override.
        compiler_params=pltpu.CompilerParams(
            dimension_semantics=("parallel",)),
    )(xp, w3, b2)


# ----------------------------------------------------------------------------
# ContextCombinedModel equivalent (all per-group heads fused at init time)
# ----------------------------------------------------------------------------
class ContextCombinedModel:
    """forward(x_list) == concat_g(sigmoid(conv1d_g(x_g)), channel axis)."""

    def __init__(self, group_params: "OrderedDict[str, tuple]",
                 compute_dtype=jnp.bfloat16):
        # group_params[group] = (w, b), w: (C_out_g, C_in_g, K), b: (C_out_g,)
        # bf16 operands by default (mem-bound kernel, bf16-native MXU on
        # v5e/v6e/v7x); accumulation is always f32 in-kernel.
        self.semantic_groups = OrderedDict(
            (g, int(p[0].shape[0])) for g, p in group_params.items())

        ws = [w for (w, _) in group_params.values()]
        bs = [b for (_, b) in group_params.values()]
        K = int(ws[0].shape[2])
        assert K % 2 == 1, "'same' padding (K-1)//2 assumes odd K (as in smtag)"
        assert all(int(w.shape[2]) == K for w in ws), "all groups must share K"
        self.K = K
        C_tot = sum(int(w.shape[1]) for w in ws)
        C_out_tot = sum(int(w.shape[0]) for w in ws)
        self.C_tot, self.C_out_tot = C_tot, C_out_tot

        # Block-diagonal weights over the concatenated channel layout, one
        # (C_out_tot, C_tot) slab per tap k, so each tap is a single MXU dot
        # covering every group.
        w_bd = jnp.zeros((K, C_out_tot, C_tot), jnp.float32)
        oo = oc = 0
        for w in ws:
            co, ci, _ = w.shape
            w_bd = w_bd.at[:, oo:oo + co, oc:oc + ci].set(
                jnp.transpose(w, (2, 0, 1)).astype(jnp.float32))
            oo += co
            oc += ci
        # TODO(synk): on v6e an int8 weight/input path (gated by
        # pltpu.get_tpu_info) would halve HBM bytes again; not portable to v7x.
        self.w3 = w_bd.astype(compute_dtype)
        self.b2 = (jnp.concatenate([b.reshape(-1) for b in bs])
                   .reshape(C_out_tot, 1).astype(jnp.float32))

        self._fwd = jax.jit(partial(_context_forward, K=K,
                                    C_out_tot=C_out_tot,
                                    compute_dtype=compute_dtype))

    def forward(self, x_list):
        return self._fwd(self.w3, self.b2, tuple(x_list))


# ----------------------------------------------------------------------------
# Pure-JAX reference for correctness checking
# ----------------------------------------------------------------------------
def _ref_conv1d_sigmoid(x, w, b):
    K = w.shape[2]
    pad = (K - 1) // 2
    xp = jnp.pad(x, ((0, 0), (0, 0), (pad, pad)))
    L = x.shape[2]
    acc = jnp.zeros((x.shape[0], w.shape[0], L), jnp.float32)
    for k in range(K):
        acc = acc + jnp.einsum("oc,ncl->nol", w[:, :, k], xp[:, :, k:k + L])
    return jax.nn.sigmoid(acc + b[None, :, None])


# ----------------------------------------------------------------------------
# Main
# ----------------------------------------------------------------------------
if __name__ == "__main__":
    key = jax.random.PRNGKey(0)

    # Small shapes consistent with smtag: 32-channel character encoding,
    # per-group output sizes mirroring the smtag semantic groups.
    N, C_IN, L, K = 2, 32, 16, 3
    group_out_channels = OrderedDict([
        ("reporter", 1),
        ("panel", 1),
        ("entity", 6),
        ("geneprod_role", 3),
        ("molecule_role", 3),
        ("disease", 1),
    ])

    # Deterministic per-group parameters.
    params = OrderedDict()
    for group, c_out in group_out_channels.items():
        key, kw, kb = jax.random.split(key, 3)
        w = jax.random.normal(kw, (c_out, C_IN, K), jnp.float32) * 0.1
        b = jax.random.normal(kb, (c_out,), jnp.float32) * 0.01
        params[group] = (w, b)

    # One (anonymized) input per sub-model.
    x_list = []
    for _ in group_out_channels:
        key, kx = jax.random.split(key)
        x_list.append(jax.random.normal(kx, (N, C_IN, L), jnp.float32))

    y_ref = jnp.concatenate(
        [_ref_conv1d_sigmoid(x, w, b)
         for (w, b), x in zip(params.values(), x_list)],
        axis=1,
    )
    total_out = sum(group_out_channels.values())

    # f32 operands: exact sigmoid (tanh identity); tolerance covers MXU
    # default-precision differences vs. the XLA reference on hardware.
    model_f32 = ContextCombinedModel(params, compute_dtype=jnp.float32)
    y = jax.block_until_ready(model_f32.forward(x_list))
    assert y.shape == (N, total_out, L), y.shape
    err = float(jnp.max(jnp.abs(y - y_ref)))
    assert err < 5e-3, err

    # Default path: bf16 operands (recommended on all generations; the kernel
    # is HBM-bandwidth-bound), f32 accumulation, looser tolerance.
    model_bf16 = ContextCombinedModel(params)
    y_bf16 = jax.block_until_ready(model_bf16.forward(x_list))
    assert y_bf16.shape == (N, total_out, L), y_bf16.shape
    err_bf16 = float(jnp.max(jnp.abs(y_bf16 - y_ref)))
    assert err_bf16 < 5e-2, err_bf16

    print("KERNEL_OK")
</pallas_src>

<mosaic_0001>
module attributes {stable_mosaic.version = 11 : i64} {
  func.func @_conv1d_sigmoid_kernel(%arg0: i32, %arg1: memref<1x192x18xf32, #tpu.memory_space<vmem>>, %arg2: memref<3x15x192xf32, #tpu.memory_space<vmem>>, %arg3: memref<15x1xf32, #tpu.memory_space<vmem>>, %arg4: memref<1x15x16xf32, #tpu.memory_space<vmem>>) attributes {dimension_semantics = [#tpu.dimension_semantics<parallel>], iteration_bounds = array<i64: 2>, scalar_prefetch = 0 : i64, scratch_operands = 0 : i64, tpu.core_type = #tpu.core_type<tc>, window_params = [{transform_indices = @transform_0, window_bounds = array<i64: 1, 192, 18>}, {pipeline_mode = #tpu.pipeline_mode<synchronous>, transform_indices = @transform_1, window_bounds = array<i64: 3, 15, 192>}, {pipeline_mode = #tpu.pipeline_mode<synchronous>, transform_indices = @transform_2, window_bounds = array<i64: 15, 1>}, {transform_indices = @transform_3, window_bounds = array<i64: 1, 15, 16>}]} {
    %c0 = arith.constant 0 : index
    %c0_0 = arith.constant 0 : index
    %c0_1 = arith.constant 0 : index
    %0 = vector.load %arg2[%c0, %c0_0, %c0_1] : memref<3x15x192xf32, #tpu.memory_space<vmem>>, vector<1x15x192xf32>
    %1 = vector.shape_cast %0 : vector<1x15x192xf32> to vector<15x192xf32>
    %c0_2 = arith.constant 0 : index
    %c0_3 = arith.constant 0 : index
    %c0_4 = arith.constant 0 : index
    %2 = vector.load %arg1[%c0_2, %c0_3, %c0_4] : memref<1x192x18xf32, #tpu.memory_space<vmem>>, vector<1x192x16xf32>
    %3 = vector.shape_cast %2 : vector<1x192x16xf32> to vector<192x16xf32>
    %cst = arith.constant dense<0.000000e+00> : vector<15x16xf32>
    %4 = tpu.matmul %1, %3, %cst {dimension_numbers = #tpu.dot_dimension_numbers<[1], [0], [0], [1], [0, 0, 1, 1], [], []>} : vector<15x192xf32>, vector<192x16xf32>, vector<15x16xf32> -> vector<15x16xf32>
    %c1 = arith.constant 1 : index
    %c0_5 = arith.constant 0 : index
    %c0_6 = arith.constant 0 : index
    %5 = vector.load %arg2[%c1, %c0_5, %c0_6] : memref<3x15x192xf32, #tpu.memory_space<vmem>>, vector<1x15x192xf32>
    %6 = vector.shape_cast %5 : vector<1x15x192xf32> to vector<15x192xf32>
    %c0_7 = arith.constant 0 : index
    %c0_8 = arith.constant 0 : index
    %c1_9 = arith.constant 1 : index
    %7 = vector.load %arg1[%c0_7, %c0_8, %c1_9] : memref<1x192x18xf32, #tpu.memory_space<vmem>>, vector<1x192x16xf32>
    %8 = vector.shape_cast %7 : vector<1x192x16xf32> to vector<192x16xf32>
    %cst_10 = arith.constant dense<0.000000e+00> : vector<15x16xf32>
    %9 = tpu.matmul %6, %8, %cst_10 {dimension_numbers = #tpu.dot_dimension_numbers<[1], [0], [0], [1], [0, 0, 1, 1], [], []>} : vector<15x192xf32>, vector<192x16xf32>, vector<15x16xf32> -> vector<15x16xf32>
    %10 = arith.addf %4, %9 : vector<15x16xf32>
    %c2 = arith.constant 2 : index
    %c0_11 = arith.constant 0 : index
    %c0_12 = arith.constant 0 : index
    %11 = vector.load %arg2[%c2, %c0_11, %c0_12] : memref<3x15x192xf32, #tpu.memory_space<vmem>>, vector<1x15x192xf32>
    %12 = vector.shape_cast %11 : vector<1x15x192xf32> to vector<15x192xf32>
    %c0_13 = arith.constant 0 : index
    %c0_14 = arith.constant 0 : index
    %c2_15 = arith.constant 2 : index
    %13 = vector.load %arg1[%c0_13, %c0_14, %c2_15] : memref<1x192x18xf32, #tpu.memory_space<vmem>>, vector<1x192x16xf32>
    %14 = vector.shape_cast %13 : vector<1x192x16xf32> to vector<192x16xf32>
    %cst_16 = arith.constant dense<0.000000e+00> : vector<15x16xf32>
    %15 = tpu.matmul %12, %14, %cst_16 {dimension_numbers = #tpu.dot_dimension_numbers<[1], [0], [0], [1], [0, 0, 1, 1], [], []>} : vector<15x192xf32>, vector<192x16xf32>, vector<15x16xf32> -> vector<15x16xf32>
    %16 = arith.addf %10, %15 : vector<15x16xf32>
    %c0_17 = arith.constant 0 : index
    %c0_18 = arith.constant 0 : index
    %17 = vector.load %arg3[%c0_17, %c0_18] : memref<15x1xf32, #tpu.memory_space<vmem>>, vector<15x1xf32>
    %18 = vector.broadcast %17 : vector<15x1xf32> to vector<15x16xf32>
    %19 = arith.addf %16, %18 : vector<15x16xf32>
    %cst_19 = arith.constant 5.000000e-01 : f32
    %20 = vector.broadcast %cst_19 : f32 to vector<15x16xf32>
    %21 = arith.mulf %20, %19 : vector<15x16xf32>
    %22 = math.tanh %21 : vector<15x16xf32>
    %cst_20 = arith.constant 5.000000e-01 : f32
    %23 = vector.broadcast %cst_20 : f32 to vector<15x16xf32>
    %24 = arith.mulf %23, %22 : vector<15x16xf32>
    %cst_21 = arith.constant 5.000000e-01 : f32
    %25 = vector.broadcast %cst_21 : f32 to vector<15x16xf32>
    %26 = arith.addf %24, %25 : vector<15x16xf32>
    %c0_22 = arith.constant 0 : index
    %c0_23 = arith.constant 0 : index
    %c0_24 = arith.constant 0 : index
    %27 = vector.load %arg4[%c0_22, %c0_23, %c0_24] : memref<1x15x16xf32, #tpu.memory_space<vmem>>, vector<1x15x16xf32>
    %28 = vector.shape_cast %27 : vector<1x15x16xf32> to vector<15x16xf32>
    %29 = vector.shape_cast %26 : vector<15x16xf32> to vector<1x15x16xf32>
    tpu.vector_store %arg4[%c0_22, %c0_23, %c0_24], %29 {strides = array<i32>} : memref<1x15x16xf32, #tpu.memory_space<vmem>>, vector<1x15x16xf32>,
    return
  }
  func.func @transform_0(%arg0: i32) -> (i32, i32, i32) {
    %c0_i32 = arith.constant 0 : i32
    %c0_i32_0 = arith.constant 0 : i32
    %c0_i32_1 = arith.constant 0 : i32
    return %arg0, %c0_i32, %c0_i32_0 : i32, i32, i32
  }
  func.func @transform_1(%arg0: i32) -> (i32, i32, i32) {
    %c0_i32 = arith.constant 0 : i32
    %c0_i32_0 = arith.constant 0 : i32
    %c0_i32_1 = arith.constant 0 : i32
    %c0_i32_2 = arith.constant 0 : i32
    return %c0_i32, %c0_i32_0, %c0_i32_1 : i32, i32, i32
  }
  func.func @transform_2(%arg0: i32) -> (i32, i32) {
    %c0_i32 = arith.constant 0 : i32
    %c0_i32_0 = arith.constant 0 : i32
    %c0_i32_1 = arith.constant 0 : i32
    return %c0_i32, %c0_i32_0 : i32, i32
  }
  func.func @transform_3(%arg0: i32) -> (i32, i32, i32) {
    %c0_i32 = arith.constant 0 : i32
    %c0_i32_0 = arith.constant 0 : i32
    %c0_i32_1 = arith.constant 0 : i32
    return %arg0, %c0_i32, %c0_i32_0 : i32, i32, i32
  }
}

</mosaic_0001>

<llo_original>
// kernel: _context_forward.1
$region0: #{_context_forward.1}
  #allocation0 [shape = 'u32[]', space=smem, size = 0x4, offset = 0x4, fixed_abs, tag = 'smem constant byte address 0x4 - core index']
  #allocation1 [shape = 'u32[72,128]{1,0:T(1,128)}', space=vmem, size = 0x9000, scoped, tag = 'internal scratch']
  %s0 = inlined_call_operand.vmem [shape: f32[2,192,18], index: 0, kind: input, shape index: {}]
  %s1 = inlined_call_operand.vmem [shape: f32[3,15,192], index: 1, kind: input, shape index: {}]
  %s2 = inlined_call_operand.vmem [shape: f32[15,1], index: 2, kind: input, shape index: {}]
  %s3 = inlined_call_operand.vmem [shape: f32[2,15,16], index: 3, kind: output, shape index: {}]
  %s4 = sld [smem:[#allocation0]]
  $region45: #{_context_forward.1} parent=0
    _
  %s6 = ssub.s32 1, %s4
  %s7 = scalar_select 0, %s6, %s4
  loop: start=0, step=1, limit=4
  $region2: #{_context_forward.1} parent=0 // loop_pre_header
    _
  $region3: #{_context_forward.1} parent=0 // loop_header
    %s9 = sphi 0, %s13
    %p10 = scmp.ge.s32.totalorder %s9, 4
    %s19 = sphi 0, %s21
    %s22 = sphi 0, %s19
    %s23 = sphi 0, %s22
    %s39 = sphi 0, %s23
    %s43 = sphi 0, %s43
    %s45 = sphi 0, %s43
    %s46 = sphi 0, %s45
    %s60 = sphi 0, %s46
    %s64 = sphi 0, %s64
    %s66 = sphi 0, %s64
    %s67 = sphi 0, %s66
    %s81 = sphi 0, %s67
    %s87 = sphi 0, %s89
    %s90 = sphi 0, %s87
    %s91 = sphi 0, %s90
    %s107 = sphi 0, %s91
  $region4: #{_context_forward.1} parent=0 // loop_header_branch
    %12 = sbr.rel (%p10) target = $region8
  $region5: #{_context_forward.1} parent=0 // loop_body
    %s14 = ssub.s32 %s9, 1
    %s15 = ssub.s32 %s9, 2
    %s16 = sadd.s32 %s9, 1
    %s17 = ssub.s32 %s9, %s16
    %p18 = scmp.eq.s32.totalorder %s17, 0
    %s20 = sadd.s32 %s19, 1
    %s21 = scalar_select %p18, %s19, %s20
    %p24 = pneg %p18
    %p25 = scmp.eq.s32.totalorder %s9, 1
    %p26 = por %p24, %p25
    %p27 = scmp.ne.s32.totalorder %s19, %s22
    %p28 = scmp.eq.s32.totalorder %s9, 0
    %p29 = por %p27, %p28
    %p30 = scmp.ne.s32.totalorder %s19, %s22
    %p31 = scmp.eq.s32.totalorder %s14, 1
    %p32 = por %p30, %p31
    %p33 = scmp.ne.s32.totalorder %s22, %s23
    %p34 = scmp.eq.s32.totalorder %s14, 0
    %p35 = por %p33, %p34
    %p36 = scmp.ne.s32.totalorder %s22, %s23
    %p37 = scmp.eq.s32.totalorder %s15, 1
    %p38 = por %p36, %p37
    %p40 = scmp.ne.s32.totalorder %s23, %s39
    %p41 = scmp.eq.s32.totalorder %s15, 0
    %p42 = por %p40, %p41
    %s44 = sadd.s32 %s43, 1
    %p47 = scmp.eq.s32.totalorder %s9, 1
    %p48 = scmp.ne.s32.totalorder %s43, %s45
    %p49 = scmp.eq.s32.totalorder %s9, 0
    %p50 = por %p48, %p49
    %p51 = scmp.ne.s32.totalorder %s43, %s45
    %p52 = scmp.eq.s32.totalorder %s14, 1
    %p53 = por %p51, %p52
    %p54 = scmp.ne.s32.totalorder %s45, %s46
    %p55 = scmp.eq.s32.totalorder %s14, 0
    %p56 = por %p54, %p55
    %p57 = scmp.ne.s32.totalorder %s45, %s46
    %p58 = scmp.eq.s32.totalorder %s15, 1
    %p59 = por %p57, %p58
    %p61 = scmp.ne.s32.totalorder %s46, %s60
    %p62 = scmp.eq.s32.totalorder %s15, 0
    %p63 = por %p61, %p62
    %s65 = sadd.s32 %s64, 1
    %p68 = scmp.eq.s32.totalorder %s9, 1
    %p69 = scmp.ne.s32.totalorder %s64, %s66
    %p70 = scmp.eq.s32.totalorder %s9, 0
    %p71 = por %p69, %p70
    %p72 = scmp.ne.s32.totalorder %s64, %s66
    %p73 = scmp.eq.s32.totalorder %s14, 1
    %p74 = por %p72, %p73
    %p75 = scmp.ne.s32.totalorder %s66, %s67
    %p76 = scmp.eq.s32.totalorder %s14, 0
    %p77 = por %p75, %p76
    %p78 = scmp.ne.s32.totalorder %s66, %s67
    %p79 = scmp.eq.s32.totalorder %s15, 1
    %p80 = por %p78, %p79
    %p82 = scmp.ne.s32.totalorder %s67, %s81
    %p83 = scmp.eq.s32.totalorder %s15, 0
    %p84 = por %p82, %p83
    %s85 = ssub.s32 %s9, %s16
    %p86 = scmp.eq.s32.totalorder %s85, 0
    %s88 = sadd.s32 %s87, 1
    %s89 = scalar_select %p86, %s87, %s88
    %p92 = pneg %p86
    %p93 = scmp.eq.s32.totalorder %s9, 1
    %p94 = por %p92, %p93
    %p95 = scmp.ne.s32.totalorder %s87, %s90
    %p96 = scmp.eq.s32.totalorder %s9, 0
    %p97 = por %p95, %p96
    %p98 = scmp.ne.s32.totalorder %s87, %s90
    %p99 = scmp.eq.s32.totalorder %s14, 1
    %p100 = por %p98, %p99
    %p101 = scmp.ne.s32.totalorder %s90, %s91
    %p102 = scmp.eq.s32.totalorder %s14, 0
    %p103 = por %p101, %p102
    %p104 = scmp.ne.s32.totalorder %s90, %s91
    %p105 = scmp.eq.s32.totalorder %s15, 1
    %p106 = por %p104, %p105
    %p108 = scmp.ne.s32.totalorder %s91, %s107
    %p109 = scmp.eq.s32.totalorder %s15, 0
    %p110 = por %p108, %p109
    %p111 = scmp.le.s32.totalorder 1, %s9
    %p112 = scmp.lt.s32.totalorder %s9, 3
    %p113 = pnand %p111, %p112
    %p114 = pneg %p113
    // Predicated region
    $region9: #{_context_forward.1} parent=5 // pred_check
      _
    $region10: #{_context_forward.1} parent=5 // pred_check_branch
      %116 = sbr.rel (%p113) target = $region12
    $region11: #{_context_forward.1} parent=5 // pred_region
      %s117 = ssub.s32 %s9, 1
      // Predicated region
      $region13: #{_context_forward.1} parent=11 // pred_check
        %p118 = pneg %p56
      $region14: #{_context_forward.1} parent=11 // pred_check_branch
        %120 = sbr.rel (%p118) target = $region16
      $region15: #{_context_forward.1} parent=11 // pred_region
        _
      $region16: #{_context_forward.1} parent=11 // pred_fallthru
        _
      // Predicated region
      $region17: #{_context_forward.1} parent=11 // pred_check
        %p121 = pneg %p77
      $region18: #{_context_forward.1} parent=11 // pred_check_branch
        %123 = sbr.rel (%p121) target = $region20
      $region19: #{_context_forward.1} parent=11 // pred_region
        _
      $region20: #{_context_forward.1} parent=11 // pred_fallthru
        _
    $region12: #{_context_forward.1} parent=5 // pred_fallthru
      _
    %p124 = scmp.lt.s32.totalorder %s9, 2
    // Predicated region
    $region21: #{_context_forward.1} parent=5 // pred_check
      %p125 = pneg %p124
    $region22: #{_context_forward.1} parent=5 // pred_check_branch
      %127 = sbr.rel (%p125) target = $region24
    $region23: #{_context_forward.1} parent=5 // pred_region
      // Predicated region
      $region25: #{_context_forward.1} parent=23 // pred_check
        %p128 = pneg %p29
      $region26: #{_context_forward.1} parent=23 // pred_check_branch
        %130 = sbr.rel (%p128) target = $region28
      $region27: #{_context_forward.1} parent=23 // pred_region
        %p131 = scmp.lt.s32.totalorder %s9, 1
        %s132 = scalar_select %p131, %s9, 1
        %s133 = smul.addr %s132, 24
        %s134 = smul.addr %s133, 8
        %s135 = scalar_lea.vmem %s0, %s134
      $region28: #{_context_forward.1} parent=23 // pred_fallthru
        _
    $region24: #{_context_forward.1} parent=5 // pred_fallthru
      _
    %p136 = scmp.le.s32.totalorder 1, %s9
    %p137 = scmp.lt.s32.totalorder %s9, 3
    %p138 = pnand %p136, %p137
    %p139 = pneg %p138
    // Predicated region
    $region29: #{_context_forward.1} parent=5 // pred_check
      _
    $region30: #{_context_forward.1} parent=5 // pred_check_branch
      %141 = sbr.rel (%p138) target = $region32
    $region31: #{_context_forward.1} parent=5 // pred_region
      %s142 = ssub.s32 %s9, 1
      %p143 = scmp.lt.s32.totalorder %s14, 1
      %s144 = scalar_select %p143, %s14, 1
      %s145 = smul.addr %s144, 24
      %s146 = smul.addr %s145, 8
      %s147 = scalar_lea.vmem %s0, %s146
      %p148 = pneg %p35
      %p149 = pneg %p32
      %p150 = pneg %p56
      %p151 = pneg %p53
      %p152 = pneg %p77
      %p153 = pneg %p74
      %p154 = pneg %p103
      %p155 = pneg %p100
      %p156 = scmp.lt.s32.totalorder %s14, 1
      %s157 = scalar_select %p156, %s14, 1
      %s158 = smul.addr %s157, 2
      %s159 = smul.addr %s158, 8
      %s160 = scalar_lea.vmem %s3, %s159
      %p161 = scmp.lt.s32.totalorder %s14, 1
      %s162 = scalar_select %p161, %s14, 1
      %s163 = smul.addr %s162, 24
      %s164 = smul.addr %s163, 8
      %s165 = scalar_lea.vmem %s0, %s164
      %p166 = scmp.lt.s32.totalorder %s14, 1
      %s167 = scalar_select %p166, %s14, 1
      %s168 = smul.addr %s167, 2
      %s169 = smul.addr %s168, 8
      %s170 = scalar_lea.vmem %s3, %s169
      %v171 = vld [vmem:[%s1] sm:$0xff]
      %v172 = vld [vmem:[%s1 + $0x8] sm:$0xff]
      %v173 = vld [vmem:[%s1 + $0x10] sm:$0x7f]
      %v174 = vld [vmem:[%s1 + $0x18] sm:$0x7f]
      %v175 = vld [vmem:[%s165] sm:$0xff]
      %v176 = vld [vmem:[%s165 + $0x8] sm:$0xff]
      %v177 = vld [vmem:[%s165 + $0x10] sm:$0xff]
      %v178 = vld [vmem:[%s165 + $0x18] sm:$0xff]
      %v179 = vld [vmem:[%s165 + $0x20] sm:$0xff]
      %v180 = vld [vmem:[%s165 + $0x28] sm:$0xff]
      %v181 = vld [vmem:[%s165 + $0x30] sm:$0xff]
      %v182 = vld [vmem:[%s165 + $0x38] sm:$0xff]
      %v183 = vld [vmem:[%s165 + $0x40] sm:$0xff]
      %v184 = vld [vmem:[%s165 + $0x48] sm:$0xff]
      %v185 = vld [vmem:[%s165 + $0x50] sm:$0xff]
      %v186 = vld [vmem:[%s165 + $0x58] sm:$0xff]
      %v187 = vld [vmem:[%s165 + $0x60] sm:$0xff]
      %v188 = vld [vmem:[%s165 + $0x68] sm:$0xff]
      %v189 = vld [vmem:[%s165 + $0x70] sm:$0xff]
      %v190 = vld [vmem:[%s165 + $0x78] sm:$0xff]
      %v191 = vld [vmem:[%s165 + $0x80] sm:$0xff]
      %v192 = vld [vmem:[%s165 + $0x88] sm:$0xff]
      %v193 = vld [vmem:[%s165 + $0x90] sm:$0xff]
      %v194 = vld [vmem:[%s165 + $0x98] sm:$0xff]
      %v195 = vld [vmem:[%s165 + $0xa0] sm:$0xff]
      %v196 = vld [vmem:[%s165 + $0xa8] sm:$0xff]
      %v197 = vld [vmem:[%s165 + $0xb0] sm:$0xff]
      %v198 = vld [vmem:[%s165 + $0xb8] sm:$0xff]
      %s199 = scalar_lea.vmem %s1, 32
      %v200 = vld [vmem:[%s199] sm:$0xff]
      %v201 = vld [vmem:[%s199 + $0x8] sm:$0xff]
      %v202 = vld [vmem:[%s199 + $0x10] sm:$0x7f]
      %v203 = vld [vmem:[%s199 + $0x18] sm:$0x7f]
      %228 = vrot.lane.b32.xlu0 %v175, 127
      %v229 = vpop.permute.xlu0 %228
      %230 = vrot.lane.b32.xlu0 %v176, 127
      %v231 = vpop.permute.xlu0 %230
      %232 = vrot.lane.b32.xlu0 %v177, 127
      %v233 = vpop.permute.xlu0 %232
      %234 = vrot.lane.b32.xlu0 %v178, 127
      %v235 = vpop.permute.xlu0 %234
      %236 = vrot.lane.b32.xlu0 %v179, 127
      %v237 = vpop.permute.xlu0 %236
      %238 = vrot.lane.b32.xlu0 %v180, 127
      %v239 = vpop.permute.xlu0 %238
      %240 = vrot.lane.b32.xlu0 %v181, 127
      %v241 = vpop.permute.xlu0 %240
      %242 = vrot.lane.b32.xlu0 %v182, 127
      %v243 = vpop.permute.xlu0 %242
      %244 = vrot.lane.b32.xlu0 %v183, 127
      %v245 = vpop.permute.xlu0 %244
      %246 = vrot.lane.b32.xlu0 %v184, 127
      %v247 = vpop.permute.xlu0 %246
      %248 = vrot.lane.b32.xlu0 %v185, 127
      %v249 = vpop.permute.xlu0 %248
      %250 = vrot.lane.b32.xlu0 %v186, 127
      %v251 = vpop.permute.xlu0 %250
      %252 = vrot.lane.b32.xlu0 %v187, 127
      %v253 = vpop.permute.xlu0 %252
      %254 = vrot.lane.b32.xlu0 %v188, 127
      %v255 = vpop.permute.xlu0 %254
      %256 = vrot.lane.b32.xlu0 %v189, 127
      %v257 = vpop.permute.xlu0 %256
      %258 = vrot.lane.b32.xlu0 %v190, 127
      %v259 = vpop.permute.xlu0 %258
      %260 = vrot.lane.b32.xlu0 %v191, 127
      %v261 = vpop.permute.xlu0 %260
      %262 = vrot.lane.b32.xlu0 %v192, 127
      %v263 = vpop.permute.xlu0 %262
      %264 = vrot.lane.b32.xlu0 %v193, 127
      %v265 = vpop.permute.xlu0 %264
      %266 = vrot.lane.b32.xlu0 %v194, 127
      %v267 = vpop.permute.xlu0 %266
      %268 = vrot.lane.b32.xlu0 %v195, 127
      %v269 = vpop.permute.xlu0 %268
      %270 = vrot.lane.b32.xlu0 %v196, 127
      %v271 = vpop.permute.xlu0 %270
      %272 = vrot.lane.b32.xlu0 %v197, 127
      %v273 = vpop.permute.xlu0 %272
      %274 = vrot.lane.b32.xlu0 %v198, 127
      %v275 = vpop.permute.xlu0 %274
      %vm300 = vcmask 523264
      %v302 = vsel %vm300, %v201, 0
      %v305 = vsel %vm300, %v203, 0
      %307 = vmatpush.msra.mxu0 %v259
      %308 = vmatpush.msra.mxu0 %v257
      %309 = vmatpush.msra.mxu0 %v255
      %310 = vmatpush.msra.mxu0 %v253
      %311 = vmatpush.msra.mxu0 %v251
      %312 = vmatpush.msra.mxu0 %v249
      %313 = vmatpush.msra.mxu0 %v247
      %314 = vmatpush.msra.mxu0 %v245
      %315 = vmatpush.msra.mxu0 %v243
      %316 = vmatpush.msra.mxu0 %v241
      %317 = vmatpush.msra.mxu0 %v239
      %318 = vmatpush.msra.mxu0 %v237
      %319 = vmatpush.msra.mxu0 %v235
      %320 = vmatpush.msra.mxu0 %v233
      %321 = vmatpush.msra.mxu0 %v231
      %322 = vmatpush.msra.mxu0 %v229
      %323 = vmatmul.f32.gmra.mxu0 %v200
      %v324 = vpop.f32.mrf.mxu0
      %v325 = vadd.f32 0.0, %v324
      %326 = vmatmul.f32.gmra.mxu0 %v202
      %v327 = vpop.f32.mrf.mxu0
      %v328 = vadd.f32 0.0, %v327
      %329 = vdwg.mxu0
      %330 = vmatpush.msra.mxu0 0.0
      %331 = vmatpush.msra.mxu0 0.0
      %332 = vmatpush.msra.mxu0 0.0
      %333 = vmatpush.msra.mxu0 0.0
      %334 = vmatpush.msra.mxu0 0.0
      %335 = vmatpush.msra.mxu0 0.0
      %336 = vmatpush.msra.mxu0 0.0
      %337 = vmatpush.msra.mxu0 0.0
      %338 = vmatpush.msra.mxu0 %v275
      %339 = vmatpush.msra.mxu0 %v273
      %340 = vmatpush.msra.mxu0 %v271
      %341 = vmatpush.msra.mxu0 %v269
      %342 = vmatpush.msra.mxu0 %v267
      %343 = vmatpush.msra.mxu0 %v265
      %344 = vmatpush.msra.mxu0 %v263
      %345 = vmatpush.msra.mxu0 %v261
      %346 = vmatmul.f32.gmra.mxu0 %v302
      %v347 = vpop.f32.mrf.mxu0
      %v348 = vadd.f32 %v325, %v347
      %349 = vmatmul.f32.gmra.mxu0 %v305
      %v350 = vpop.f32.mrf.mxu0
      %v351 = vadd.f32 %v328, %v350
      %352 = vdwg.mxu0
      %v354 = vsel %vm300, %v172, 0
      %v357 = vsel %vm300, %v174, 0
      %359 = vmatpush.msra.mxu0 %v190
      %360 = vmatpush.msra.mxu0 %v189
      %361 = vmatpush.msra.mxu0 %v188
      %362 = vmatpush.msra.mxu0 %v187
      %363 = vmatpush.msra.mxu0 %v186
      %364 = vmatpush.msra.mxu0 %v185
      %365 = vmatpush.msra.mxu0 %v184
      %366 = vmatpush.msra.mxu0 %v183
      %367 = vmatpush.msra.mxu0 %v182
      %368 = vmatpush.msra.mxu0 %v181
      %369 = vmatpush.msra.mxu0 %v180
      %370 = vmatpush.msra.mxu0 %v179
      %371 = vmatpush.msra.mxu0 %v178
      %372 = vmatpush.msra.mxu0 %v177
      %373 = vmatpush.msra.mxu0 %v176
      %374 = vmatpush.msra.mxu0 %v175
      %375 = vmatmul.f32.gmra.mxu0 %v171
      %v376 = vpop.f32.mrf.mxu0
      %v377 = vadd.f32 %v348, %v376
      %378 = vmatmul.f32.gmra.mxu0 %v173
      %v379 = vpop.f32.mrf.mxu0
      %v380 = vadd.f32 %v351, %v379
      %381 = vdwg.mxu0
      %382 = vmatpush.msra.mxu0 0.0
      %383 = vmatpush.msra.mxu0 0.0
      %384 = vmatpush.msra.mxu0 0.0
      %385 = vmatpush.msra.mxu0 0.0
      %386 = vmatpush.msra.mxu0 0.0
      %387 = vmatpush.msra.mxu0 0.0
      %388 = vmatpush.msra.mxu0 0.0
      %389 = vmatpush.msra.mxu0 0.0
      %390 = vmatpush.msra.mxu0 %v198
      %391 = vmatpush.msra.mxu0 %v197
      %392 = vmatpush.msra.mxu0 %v196
      %393 = vmatpush.msra.mxu0 %v195
      %394 = vmatpush.msra.mxu0 %v194
      %395 = vmatpush.msra.mxu0 %v193
      %396 = vmatpush.msra.mxu0 %v192
      %397 = vmatpush.msra.mxu0 %v191
      %398 = vmatmul.f32.gmra.mxu0 %v354
      %v399 = vpop.f32.mrf.mxu0
      %v400 = vadd.f32 %v377, %v399
      %401 = vmatmul.f32.gmra.mxu0 %v357
      %v402 = vpop.f32.mrf.mxu0
      %v403 = vadd.f32 %v380, %v402
      %404 = vdwg.mxu0
      %s405 = scalar_lea.vmem %s1, 64
      %v406 = vld [vmem:[%s405] sm:$0xff]
      %v407 = vld [vmem:[%s405 + $0x8] sm:$0xff]
      %v408 = vld [vmem:[%s405 + $0x10] sm:$0x7f]
      %v409 = vld [vmem:[%s405 + $0x18] sm:$0x7f]
      %410 = vrot.lane.b32.xlu0 %v175, 126
      %v411 = vpop.permute.xlu0 %410
      %412 = vrot.lane.b32.xlu0 %v176, 126
      %v413 = vpop.permute.xlu0 %412
      %414 = vrot.lane.b32.xlu0 %v177, 126
      %v415 = vpop.permute.xlu0 %414
      %416 = vrot.lane.b32.xlu0 %v178, 126
      %v417 = vpop.permute.xlu0 %416
      %418 = vrot.lane.b32.xlu0 %v179, 126
      %v419 = vpop.permute.xlu0 %418
      %420 = vrot.lane.b32.xlu0 %v180, 126
      %v421 = vpop.permute.xlu0 %420
      %422 = vrot.lane.b32.xlu0 %v181, 126
      %v423 = vpop.permute.xlu0 %422
      %424 = vrot.lane.b32.xlu0 %v182, 126
      %v425 = vpop.permute.xlu0 %424
      %426 = vrot.lane.b32.xlu0 %v183, 126
      %v427 = vpop.permute.xlu0 %426
      %428 = vrot.lane.b32.xlu0 %v184, 126
      %v429 = vpop.permute.xlu0 %428
      %430 = vrot.lane.b32.xlu0 %v185, 126
      %v431 = vpop.permute.xlu0 %430
      %432 = vrot.lane.b32.xlu0 %v186, 126
      %v433 = vpop.permute.xlu0 %432
      %434 = vrot.lane.b32.xlu0 %v187, 126
      %v435 = vpop.permute.xlu0 %434
      %436 = vrot.lane.b32.xlu0 %v188, 126
      %v437 = vpop.permute.xlu0 %436
      %438 = vrot.lane.b32.xlu0 %v189, 126
      %v439 = vpop.permute.xlu0 %438
      %440 = vrot.lane.b32.xlu0 %v190, 126
      %v441 = vpop.permute.xlu0 %440
      %442 = vrot.lane.b32.xlu0 %v191, 126
      %v443 = vpop.permute.xlu0 %442
      %444 = vrot.lane.b32.xlu0 %v192, 126
      %v445 = vpop.permute.xlu0 %444
      %446 = vrot.lane.b32.xlu0 %v193, 126
      %v447 = vpop.permute.xlu0 %446
      %448 = vrot.lane.b32.xlu0 %v194, 126
      %v449 = vpop.permute.xlu0 %448
      %450 = vrot.lane.b32.xlu0 %v195, 126
      %v451 = vpop.permute.xlu0 %450
      %452 = vrot.lane.b32.xlu0 %v196, 126
      %v453 = vpop.permute.xlu0 %452
      %454 = vrot.lane.b32.xlu0 %v197, 126
      %v455 = vpop.permute.xlu0 %454
      %456 = vrot.lane.b32.xlu0 %v198, 126
      %v457 = vpop.permute.xlu0 %456
      %v483 = vsel %vm300, %v407, 0
      %v486 = vsel %vm300, %v409, 0
      %488 = vmatpush.msra.mxu0 %v441
      %489 = vmatpush.msra.mxu0 %v439
      %490 = vmatpush.msra.mxu0 %v437
      %491 = vmatpush.msra.mxu0 %v435
      %492 = vmatpush.msra.mxu0 %v433
      %493 = vmatpush.msra.mxu0 %v431
      %494 = vmatpush.msra.mxu0 %v429
      %495 = vmatpush.msra.mxu0 %v427
      %496 = vmatpush.msra.mxu0 %v425
      %497 = vmatpush.msra.mxu0 %v423
      %498 = vmatpush.msra.mxu0 %v421
      %499 = vmatpush.msra.mxu0 %v419
      %500 = vmatpush.msra.mxu0 %v417
      %501 = vmatpush.msra.mxu0 %v415
      %502 = vmatpush.msra.mxu0 %v413
      %503 = vmatpush.msra.mxu0 %v411
      %504 = vmatmul.f32.gmra.mxu0 %v406
      %v505 = vpop.f32.mrf.mxu0
      %v506 = vadd.f32 0.0, %v505
      %507 = vmatmul.f32.gmra.mxu0 %v408
      %v508 = vpop.f32.mrf.mxu0
      %v509 = vadd.f32 0.0, %v508
      %510 = vdwg.mxu0
      %511 = vmatpush.msra.mxu0 0.0
      %512 = vmatpush.msra.mxu0 0.0
      %513 = vmatpush.msra.mxu0 0.0
      %514 = vmatpush.msra.mxu0 0.0
      %515 = vmatpush.msra.mxu0 0.0
      %516 = vmatpush.msra.mxu0 0.0
      %517 = vmatpush.msra.mxu0 0.0
      %518 = vmatpush.msra.mxu0 0.0
      %519 = vmatpush.msra.mxu0 %v457
      %520 = vmatpush.msra.mxu0 %v455
      %521 = vmatpush.msra.mxu0 %v453
      %522 = vmatpush.msra.mxu0 %v451
      %523 = vmatpush.msra.mxu0 %v449
      %524 = vmatpush.msra.mxu0 %v447
      %525 = vmatpush.msra.mxu0 %v445
      %526 = vmatpush.msra.mxu0 %v443
      %527 = vmatmul.f32.gmra.mxu0 %v483
      %v528 = vpop.f32.mrf.mxu0
      %v529 = vadd.f32 %v506, %v528
      %530 = vmatmul.f32.gmra.mxu0 %v486
      %v531 = vpop.f32.mrf.mxu0
      %v532 = vadd.f32 %v509, %v531
      %533 = vdwg.mxu0
      %v534 = vadd.f32 %v400, %v529
      %v535 = vadd.f32 %v403, %v532
      %v536 = vld [vmem:[%s2] sm:$0xff]
      %v537 = vld [vmem:[%s2 + $0x8] sm:$0x7f]
      %539 = vset.pattern.permute.xlu0 0
      %540 = vperm.xlu0 %539, %v536
      %v541 = vpop.permute.xlu0 %540
      %544 = vset.pattern.permute.xlu0 0
      %545 = vperm.xlu0 %544, %v537
      %v546 = vpop.permute.xlu0 %545
      %v548 = vadd.f32 %v534, %v541
      %v549 = vadd.f32 %v535, %v546
      %v550 = vmul.f32 %v548, 0.5
      %v551 = vmul.f32 %v549, 0.5
      %v552 = vtanh.pop %v550
      %v553 = vtanh.pop %v551
      %v554 = vmul.f32 %v552, 0.5
      %v555 = vmul.f32 %v553, 0.5
      %v556 = vadd.f32 %v554, 0.5
      %v557 = vadd.f32 %v555, 0.5
      %vm558 = vcmask 130048
      %559 = vst.msk [vmem:[%s170] sm:$0xff] %vm558, %v556
      %vm560 = vcmask 129024
      %561 = vst.msk [vmem:[%s170 + $0x8] sm:$0x7f] %vm560, %v557
      %p562 = scmp.lt.s32.totalorder %s14, 1
      %s563 = scalar_select %p562, %s14, 1
      %s564 = smul.addr %s563, 2
      %s565 = smul.addr %s564, 8
      %s566 = scalar_lea.vmem %s3, %s565
      // Predicated region
      $region33: #{_context_forward.1} parent=31 // pred_check
        %p567 = pneg %p100
      $region34: #{_context_forward.1} parent=31 // pred_check_branch
        %569 = sbr.rel (%p567) target = $region36
      $region35: #{_context_forward.1} parent=31 // pred_region
        _
      $region36: #{_context_forward.1} parent=31 // pred_fallthru
        _
    $region32: #{_context_forward.1} parent=5 // pred_fallthru
      _
    %p570 = scmp.le.s32.totalorder 2, %s9
    // Predicated region
    $region37: #{_context_forward.1} parent=5 // pred_check
      %p571 = pneg %p570
    $region38: #{_context_forward.1} parent=5 // pred_check_branch
      %573 = sbr.rel (%p571) target = $region40
    $region39: #{_context_forward.1} parent=5 // pred_region
      %s574 = ssub.s32 %s9, 2
      // Predicated region
      $region41: #{_context_forward.1} parent=39 // pred_check
        %p575 = pneg %p106
      $region42: #{_context_forward.1} parent=39 // pred_check_branch
        %577 = sbr.rel (%p575) target = $region44
      $region43: #{_context_forward.1} parent=39 // pred_region
        %p578 = scmp.lt.s32.totalorder %s15, 1
        %s579 = scalar_select %p578, %s15, 1
        %s580 = smul.addr %s579, 2
        %s581 = smul.addr %s580, 8
        %s582 = scalar_lea.vmem %s3, %s581
      $region44: #{_context_forward.1} parent=39 // pred_fallthru
        _
    $region40: #{_context_forward.1} parent=5 // pred_fallthru
      _
  $region6: #{_context_forward.1} parent=0 // loop_footer
    %s13 = sadd.s32 1, %s9
  $region7: #{_context_forward.1} parent=0 // loop_footer_branch
    %8 = sbr.rel target = $region3
  $region8: #{_context_forward.1} parent=0 // loop_exit
    _

</llo_original>
